<compile_context>
chip_gen: v6e
topology: v6e:2x2x1
jax: 0.10.0
libtpu: 0.0.40
codegen_flags: <defaults>
</compile_context>

<pallas_src>
import functools

import numpy as np
import jax
import jax.numpy as jnp
from jax.experimental import pallas as pl
from jax.experimental.pallas import tpu as pltpu


H_PAD = 128        # hidden dim padded to one lane width (64 -> 128)
OUT_PAD = 8        # 2 logits padded to 8 lanes (full-array last dim => legal block)
TILE_B_MAX = 1024  # per-step overhead amortized well past 512-row tiles
MIN_GRID = 4       # aim for >=4 batch tiles so "parallel" shards across v7x's 2 TCs
VMEM_STREAM_BUDGET = 24 * 1024 * 1024  # bytes for the double-buffered x/out stream


def _round_up(n, m):
    return ((n + m - 1) // m) * m


def dnet_kernel(x_ref, w1_ref, b1_ref, w2_ref, b2_ref, o_ref, *, compute_dtype):
    x = x_ref[...]
    if x.dtype != compute_dtype:
        # Per-tile in-kernel cast (free on the VPU) instead of a wrapper-side
        # astype that would add a full extra HBM read+write pass over x.
        x = x.astype(compute_dtype)
    # Hidden layer on the MXU with f32 accumulation: (TB, D) @ (D, 128).
    h = jnp.dot(x, w1_ref[...], preferred_element_type=jnp.float32)
    # Bias add + ReLU in f32 on the VPU (hidden under the DMA/MXU critical path).
    h = jnp.maximum(h + b1_ref[...], jnp.float32(0.0))
    # Output layer: (TB, 128) @ (128, 8) -> narrow (TB, 8) store.
    out = jnp.dot(h.astype(w2_ref.dtype), w2_ref[...],
                  preferred_element_type=jnp.float32)
    o_ref[...] = (out + b2_ref[...]).astype(o_ref.dtype)


def _choose_tile_b(B, D, x_itemsize):
    # Per-row VMEM cost of the pipelined stream: x (x2 buffers) + out (x2) + f32 hidden.
    per_row = 2 * D * x_itemsize + 2 * OUT_PAD * 4 + H_PAD * 4
    vmem_cap = max(8, (VMEM_STREAM_BUDGET // per_row) // 8 * 8)
    # >= MIN_GRID grid steps when B is large enough (megacore sharding on v7x).
    target = _round_up(pl.cdiv(B, MIN_GRID), 8)
    return max(8, min(TILE_B_MAX, vmem_cap, target, _round_up(B, 8)))


@functools.partial(jax.jit, static_argnames=("compute_dtype",))
def dnet_forward(x, w1, b1, w2, b2, *, compute_dtype=jnp.float32):
    """x: (B, D); w1: (D, H); b1: (1, H); w2: (H, 2); b2: (1, 2) -> (B, 2) f32.

    compute_dtype=jnp.bfloat16 casts x (in-kernel) and the resident weights to
    bf16 for the matmuls (f32 accumulation) -- recommended on v5e whose MXU is
    bf16-native -- at ~1e-2 logit precision.  Default f32 matches the reference
    to 1e-5.
    """
    B, D = x.shape
    H = w1.shape[1]
    n_out = w2.shape[1]

    # Lane-dense zero padding of the tiny weight/bias tensors (numerically inert
    # through ReLU and the second matmul).
    w1p = jnp.pad(w1, ((0, 0), (0, H_PAD - H))).astype(compute_dtype)
    b1p = jnp.pad(b1, ((0, 0), (0, H_PAD - H))).astype(jnp.float32)
    w2p = jnp.pad(w2, ((0, H_PAD - H), (0, OUT_PAD - n_out))).astype(compute_dtype)
    b2p = jnp.pad(b2, ((0, 0), (0, OUT_PAD - n_out))).astype(jnp.float32)

    x_itemsize = np.dtype(x.dtype).itemsize
    w_itemsize = np.dtype(compute_dtype).itemsize
    tile_b = _choose_tile_b(B, D, x_itemsize)
    grid = (pl.cdiv(B, tile_b),)

    # Explicit VMEM budget so depth-2 pipelining survives v7x's 64 MiB VMEM and
    # we never rely on the (chip-dependent) default scoped limit.
    vmem_bytes = (
        2 * tile_b * D * x_itemsize                      # x, double-buffered
        + 2 * tile_b * OUT_PAD * 4                       # out, double-buffered
        + D * H_PAD * w_itemsize + H_PAD * 4             # resident w1, b1
        + H_PAD * OUT_PAD * w_itemsize + OUT_PAD * 4     # resident w2, b2
        + 2 * tile_b * H_PAD * 4                         # hidden intermediate headroom
    )
    vmem_limit = int(min(max(2 * vmem_bytes, 32 * 1024 * 1024), 56 * 1024 * 1024))

    cost = pl.CostEstimate(
        flops=2 * B * (D * H_PAD + H_PAD * OUT_PAD),
        transcendentals=0,
        bytes_accessed=(B * D * x_itemsize + B * OUT_PAD * 4
                        + D * H_PAD * w_itemsize + H_PAD * OUT_PAD * w_itemsize
                        + (H_PAD + OUT_PAD) * 4),
    )

    out = pl.pallas_call(
        functools.partial(dnet_kernel, compute_dtype=compute_dtype),
        out_shape=jax.ShapeDtypeStruct((B, OUT_PAD), jnp.float32),
        grid=grid,
        in_specs=[
            # x streamed per batch tile (pipelined DMA overlaps compute).
            pl.BlockSpec((tile_b, D), lambda i: (i, 0)),
            # Weights/biases: constant index_map -> DMA'd once, VMEM-resident.
            pl.BlockSpec((D, H_PAD), lambda i: (0, 0)),
            pl.BlockSpec((1, H_PAD), lambda i: (0, 0)),
            pl.BlockSpec((H_PAD, OUT_PAD), lambda i: (0, 0)),
            pl.BlockSpec((1, OUT_PAD), lambda i: (0, 0)),
        ],
        out_specs=pl.BlockSpec((tile_b, OUT_PAD), lambda i: (i, 0)),
        compiler_params=pltpu.CompilerParams(
            dimension_semantics=("parallel",),
            vmem_limit_bytes=vmem_limit,
        ),
        cost_estimate=cost,
    )(x, w1p, b1p, w2p, b2p)

    # Strip only the padded logit lanes (no batch padding was introduced).
    return out[:, :n_out]


def init_dnet_params(key, input_dim, hidden_dim=64):
    """Deterministic init mimicking nn.Linear default (uniform +-1/sqrt(fan_in))."""
    k1, k2, k3, k4 = jax.random.split(key, 4)
    lim1 = 1.0 / jnp.sqrt(jnp.float32(input_dim))
    lim2 = 1.0 / jnp.sqrt(jnp.float32(hidden_dim))
    # Stored transposed relative to PyTorch: (in, out) so the kernel does x @ W.
    w1 = jax.random.uniform(k1, (input_dim, hidden_dim), jnp.float32, -lim1, lim1)
    b1 = jax.random.uniform(k2, (1, hidden_dim), jnp.float32, -lim1, lim1)
    w2 = jax.random.uniform(k3, (hidden_dim, 2), jnp.float32, -lim2, lim2)
    b2 = jax.random.uniform(k4, (1, 2), jnp.float32, -lim2, lim2)
    return w1, b1, w2, b2


if __name__ == "__main__":
    key = jax.random.PRNGKey(0)
    kx, kp = jax.random.split(key)

    batch, input_dim, hidden_dim = 8, 32, 64
    x = jax.random.normal(kx, (batch, input_dim), dtype=jnp.float32)
    w1, b1, w2, b2 = init_dnet_params(kp, input_dim, hidden_dim)

    logits = dnet_forward(x, w1, b1, w2, b2)
    jax.block_until_ready(logits)

    # Pure-JAX reference check of the same forward pass (f32 path).
    ref = jnp.maximum(x @ w1 + b1, 0.0) @ w2 + b2
    assert logits.shape == (batch, 2)
    assert jnp.allclose(logits, ref, atol=1e-5, rtol=1e-5)

    print("KERNEL_OK")
</pallas_src>

<mosaic_0001>
module attributes {stable_mosaic.version = 11 : i64} {
  func.func @dnet_kernel(%arg0: i32, %arg1: memref<8x32xf32, #tpu.memory_space<vmem>>, %arg2: memref<32x128xf32, #tpu.memory_space<vmem>>, %arg3: memref<1x128xf32, #tpu.memory_space<vmem>>, %arg4: memref<128x8xf32, #tpu.memory_space<vmem>>, %arg5: memref<1x8xf32, #tpu.memory_space<vmem>>, %arg6: memref<8x8xf32, #tpu.memory_space<vmem>>) attributes {dimension_semantics = [#tpu.dimension_semantics<parallel>], iteration_bounds = array<i64: 1>, scalar_prefetch = 0 : i64, scratch_operands = 0 : i64, tpu.core_type = #tpu.core_type<tc>, window_params = [{transform_indices = @transform_0, window_bounds = array<i64: 8, 32>}, {pipeline_mode = #tpu.pipeline_mode<synchronous>, transform_indices = @transform_1, window_bounds = array<i64: 32, 128>}, {pipeline_mode = #tpu.pipeline_mode<synchronous>, transform_indices = @transform_2, window_bounds = array<i64: 1, 128>}, {pipeline_mode = #tpu.pipeline_mode<synchronous>, transform_indices = @transform_3, window_bounds = array<i64: 128, 8>}, {pipeline_mode = #tpu.pipeline_mode<synchronous>, transform_indices = @transform_4, window_bounds = array<i64: 1, 8>}, {transform_indices = @transform_5, window_bounds = array<i64: 8, 8>}]} {
    %c0 = arith.constant 0 : index
    %c0_0 = arith.constant 0 : index
    %0 = vector.load %arg1[%c0, %c0_0] : memref<8x32xf32, #tpu.memory_space<vmem>>, vector<8x32xf32>
    %c0_1 = arith.constant 0 : index
    %c0_2 = arith.constant 0 : index
    %1 = vector.load %arg2[%c0_1, %c0_2] : memref<32x128xf32, #tpu.memory_space<vmem>>, vector<32x128xf32>
    %cst = arith.constant dense<0.000000e+00> : vector<8x128xf32>
    %2 = tpu.matmul %0, %1, %cst {dimension_numbers = #tpu.dot_dimension_numbers<[1], [0], [0], [1], [0, 0, 1, 1], [], []>} : vector<8x32xf32>, vector<32x128xf32>, vector<8x128xf32> -> vector<8x128xf32>
    %c0_3 = arith.constant 0 : index
    %c0_4 = arith.constant 0 : index
    %3 = vector.load %arg3[%c0_3, %c0_4] : memref<1x128xf32, #tpu.memory_space<vmem>>, vector<1x128xf32>
    %4 = vector.broadcast %3 : vector<1x128xf32> to vector<8x128xf32>
    %5 = arith.addf %2, %4 : vector<8x128xf32>
    %cst_5 = arith.constant 0.000000e+00 : f32
    %6 = vector.broadcast %cst_5 : f32 to vector<8x128xf32>
    %7 = arith.maximumf %5, %6 : vector<8x128xf32>
    %c0_6 = arith.constant 0 : index
    %c0_7 = arith.constant 0 : index
    %8 = vector.load %arg4[%c0_6, %c0_7] : memref<128x8xf32, #tpu.memory_space<vmem>>, vector<128x8xf32>
    %cst_8 = arith.constant dense<0.000000e+00> : vector<8x8xf32>
    %9 = tpu.matmul %7, %8, %cst_8 {dimension_numbers = #tpu.dot_dimension_numbers<[1], [0], [0], [1], [0, 0, 1, 1], [], []>} : vector<8x128xf32>, vector<128x8xf32>, vector<8x8xf32> -> vector<8x8xf32>
    %c0_9 = arith.constant 0 : index
    %c0_10 = arith.constant 0 : index
    %10 = vector.load %arg5[%c0_9, %c0_10] : memref<1x8xf32, #tpu.memory_space<vmem>>, vector<1x8xf32>
    %11 = vector.broadcast %10 : vector<1x8xf32> to vector<8x8xf32>
    %12 = arith.addf %9, %11 : vector<8x8xf32>
    %c0_11 = arith.constant 0 : index
    %c0_12 = arith.constant 0 : index
    %13 = vector.load %arg6[%c0_11, %c0_12] : memref<8x8xf32, #tpu.memory_space<vmem>>, vector<8x8xf32>
    tpu.vector_store %arg6[%c0_11, %c0_12], %12 {strides = array<i32>} : memref<8x8xf32, #tpu.memory_space<vmem>>, vector<8x8xf32>,
    return
  }
  func.func @transform_0(%arg0: i32) -> (i32, i32) {
    %c0_i32 = arith.constant 0 : i32
    %c0_i32_0 = arith.constant 0 : i32
    return %arg0, %c0_i32 : i32, i32
  }
  func.func @transform_1(%arg0: i32) -> (i32, i32) {
    %c0_i32 = arith.constant 0 : i32
    %c0_i32_0 = arith.constant 0 : i32
    %c0_i32_1 = arith.constant 0 : i32
    return %c0_i32, %c0_i32_0 : i32, i32
  }
  func.func @transform_2(%arg0: i32) -> (i32, i32) {
    %c0_i32 = arith.constant 0 : i32
    %c0_i32_0 = arith.constant 0 : i32
    %c0_i32_1 = arith.constant 0 : i32
    return %c0_i32, %c0_i32_0 : i32, i32
  }
  func.func @transform_3(%arg0: i32) -> (i32, i32) {
    %c0_i32 = arith.constant 0 : i32
    %c0_i32_0 = arith.constant 0 : i32
    %c0_i32_1 = arith.constant 0 : i32
    return %c0_i32, %c0_i32_0 : i32, i32
  }
  func.func @transform_4(%arg0: i32) -> (i32, i32) {
    %c0_i32 = arith.constant 0 : i32
    %c0_i32_0 = arith.constant 0 : i32
    %c0_i32_1 = arith.constant 0 : i32
    return %c0_i32, %c0_i32_0 : i32, i32
  }
  func.func @transform_5(%arg0: i32) -> (i32, i32) {
    %c0_i32 = arith.constant 0 : i32
    %c0_i32_0 = arith.constant 0 : i32
    return %arg0, %c0_i32 : i32, i32
  }
}

</mosaic_0001>

<llo_original>
// kernel: dnet_forward.1
$region0: #{dnet_forward.1}
  #allocation0 [shape = 'u32[]', space=smem, size = 0x4, offset = 0x4, fixed_abs, tag = 'smem constant byte address 0x4 - core index']
  #allocation1 [shape = 'u32[144,128]{1,0:T(1,128)}', space=vmem, size = 0x12000, scoped, tag = 'internal scratch']
  %s0 = inlined_call_operand.vmem [shape: f32[8,32], index: 0, kind: input, shape index: {}]
  %s1 = inlined_call_operand.vmem [shape: f32[32,128], index: 1, kind: input, shape index: {}]
  %s2 = inlined_call_operand.vmem [shape: f32[1,128], index: 2, kind: input, shape index: {}]
  %s3 = inlined_call_operand.vmem [shape: f32[128,8], index: 3, kind: input, shape index: {}]
  %s4 = inlined_call_operand.vmem [shape: f32[1,8], index: 4, kind: input, shape index: {}]
  %s5 = inlined_call_operand.vmem [shape: f32[8,8], index: 5, kind: output, shape index: {}]
  %s6 = sld [smem:[#allocation0]]
  $region30: #{dnet_forward.1} parent=0
    _
  %s8 = ssub.s32 1, %s6
  %s9 = scalar_select 0, %s8, %s6
  // Predicated region
  $region2: #{dnet_forward.1} parent=0 // pred_check
    _
  $region3: #{dnet_forward.1} parent=0 // pred_check_branch
    %11 = sbr.rel (0) target = $region5
  $region4: #{dnet_forward.1} parent=0 // pred_region
    _
  $region5: #{dnet_forward.1} parent=0 // pred_fallthru
    _
  // Predicated region
  $region6: #{dnet_forward.1} parent=0 // pred_check
    _
  $region7: #{dnet_forward.1} parent=0 // pred_check_branch
    %13 = sbr.rel (0) target = $region9
  $region8: #{dnet_forward.1} parent=0 // pred_region
    _
  $region9: #{dnet_forward.1} parent=0 // pred_fallthru
    _
  // Predicated region
  $region10: #{dnet_forward.1} parent=0 // pred_check
    _
  $region11: #{dnet_forward.1} parent=0 // pred_check_branch
    %15 = sbr.rel (0) target = $region13
  $region12: #{dnet_forward.1} parent=0 // pred_region
    _
  $region13: #{dnet_forward.1} parent=0 // pred_fallthru
    _
  // Predicated region
  $region14: #{dnet_forward.1} parent=0 // pred_check
    _
  $region15: #{dnet_forward.1} parent=0 // pred_check_branch
    %17 = sbr.rel (0) target = $region17
  $region16: #{dnet_forward.1} parent=0 // pred_region
    _
  $region17: #{dnet_forward.1} parent=0 // pred_fallthru
    _
  // Predicated region
  $region18: #{dnet_forward.1} parent=0 // pred_check
    _
  $region19: #{dnet_forward.1} parent=0 // pred_check_branch
    %19 = sbr.rel (0) target = $region21
  $region20: #{dnet_forward.1} parent=0 // pred_region
    _
  $region21: #{dnet_forward.1} parent=0 // pred_fallthru
    _
  %v20 = vld [vmem:[%s0] sm:$0xff]
  %v21 = vld [vmem:[%s1] sm:$0xff]
  %v22 = vld [vmem:[%s1 + $0x8] sm:$0xff]
  %v23 = vld [vmem:[%s1 + $0x10] sm:$0xff]
  %v24 = vld [vmem:[%s1 + $0x18] sm:$0xff]
  %v25 = vld [vmem:[%s2] sm:$0x1]
  %v27 = vlaneseq
  %v28 = vshrl.u32 %v27, 7
  %v29 = vsub.s32 0, %v28
  %v30 = vrot.slane %v25, %v29
  %vm32 = vcmask 261120
  %v34 = vsel %vm32, %v20, 0
  %36 = vmatprep.subr.mxu0 0.0
  %37 = vmatpush1.msra.mxu0 0.0
  %38 = vmatprep.subr.mxu0 0.0
  %39 = vmatpush1.msra.mxu0 0.0
  %40 = vmatprep.subr.mxu0 0.0
  %41 = vmatpush1.msra.mxu0 0.0
  %42 = vmatprep.subr.mxu0 0.0
  %43 = vmatpush1.msra.mxu0 0.0
  %44 = vmatprep.subr.mxu0 0.0
  %45 = vmatpush1.msra.mxu0 0.0
  %46 = vmatprep.subr.mxu0 0.0
  %47 = vmatpush1.msra.mxu0 0.0
  %48 = vmatprep.subr.mxu0 0.0
  %49 = vmatpush1.msra.mxu0 0.0
  %50 = vmatprep.subr.mxu0 0.0
  %51 = vmatpush1.msra.mxu0 0.0
  %52 = vmatprep.subr.mxu0 0.0
  %53 = vmatpush1.msra.mxu0 0.0
  %54 = vmatprep.subr.mxu0 0.0
  %55 = vmatpush1.msra.mxu0 0.0
  %56 = vmatprep.subr.mxu0 0.0
  %57 = vmatpush1.msra.mxu0 0.0
  %58 = vmatprep.subr.mxu0 0.0
  %59 = vmatpush1.msra.mxu0 0.0
  %60 = vmatprep.subr.mxu0 0.0
  %61 = vmatpush1.msra.mxu0 %v24
  %62 = vmatprep.subr.mxu0 0.0
  %63 = vmatpush1.msra.mxu0 %v23
  %64 = vmatprep.subr.mxu0 0.0
  %65 = vmatpush1.msra.mxu0 %v22
  %66 = vmatprep.subr.mxu0 0.0
  %67 = vmatpush1.msra.mxu0 %v21
  %68 = vmatprep.subr.mxu0 0.0
  %69 = vmatpush2.msra.mxu0 0.0
  %70 = vmatprep.subr.mxu0 0.0
  %71 = vmatpush2.msra.mxu0 0.0
  %72 = vmatprep.subr.mxu0 0.0
  %73 = vmatpush2.msra.mxu0 0.0
  %74 = vmatprep.subr.mxu0 0.0
  %75 = vmatpush2.msra.mxu0 0.0
  %76 = vmatprep.subr.mxu0 0.0
  %77 = vmatpush2.msra.mxu0 0.0
  %78 = vmatprep.subr.mxu0 0.0
  %79 = vmatpush2.msra.mxu0 0.0
  %80 = vmatprep.subr.mxu0 0.0
  %81 = vmatpush2.msra.mxu0 0.0
  %82 = vmatprep.subr.mxu0 0.0
  %83 = vmatpush2.msra.mxu0 0.0
  %84 = vmatprep.subr.mxu0 0.0
  %85 = vmatpush2.msra.mxu0 0.0
  %86 = vmatprep.subr.mxu0 0.0
  %87 = vmatpush2.msra.mxu0 0.0
  %88 = vmatprep.subr.mxu0 0.0
  %89 = vmatpush2.msra.mxu0 0.0
  %90 = vmatprep.subr.mxu0 0.0
  %91 = vmatpush2.msra.mxu0 0.0
  %92 = vmatprep.subr.mxu0 0.0
  %93 = vmatpush2.msra.mxu0 0.0
  %94 = vmatprep.subr.mxu0 0.0
  %95 = vmatpush2.msra.mxu0 0.0
  %96 = vmatprep.subr.mxu0 0.0
  %97 = vmatpush2.msra.mxu0 0.0
  %98 = vmatprep.subr.mxu0 0.0
  %99 = vmatpush2.msra.mxu0 0.0
  %100 = vmatprep.mubr.f32.mxu0 0.0
  %101 = vmatmul.mubr.f32.gmra.mxu0 %v34
  %v102 = vpop.f32.mrf.mxu0
  %v103 = vadd.f32 %v30, %v102
  %v104 = vpop.f32.mrf.mxu0
  %105 = vdwg.mxu0
  %v106 = vmax.f32 %v103, 0.0
  %v107 = vld [vmem:[%s3] sm:$0xff]
  %v108 = vld [vmem:[%s3 + $0x8] sm:$0xff]
  %v109 = vld [vmem:[%s3 + $0x10] sm:$0xff]
  %v110 = vld [vmem:[%s3 + $0x18] sm:$0xff]
  %v111 = vld [vmem:[%s3 + $0x20] sm:$0xff]
  %v112 = vld [vmem:[%s3 + $0x28] sm:$0xff]
  %v113 = vld [vmem:[%s3 + $0x30] sm:$0xff]
  %v114 = vld [vmem:[%s3 + $0x38] sm:$0xff]
  %v115 = vld [vmem:[%s3 + $0x40] sm:$0xff]
  %v116 = vld [vmem:[%s3 + $0x48] sm:$0xff]
  %v117 = vld [vmem:[%s3 + $0x50] sm:$0xff]
  %v118 = vld [vmem:[%s3 + $0x58] sm:$0xff]
  %v119 = vld [vmem:[%s3 + $0x60] sm:$0xff]
  %v120 = vld [vmem:[%s3 + $0x68] sm:$0xff]
  %v121 = vld [vmem:[%s3 + $0x70] sm:$0xff]
  %v122 = vld [vmem:[%s3 + $0x78] sm:$0xff]
  %v123 = vld [vmem:[%s4] sm:$0x1]
  %v125 = vlaneseq
  %v126 = vshrl.u32 %v125, 7
  %v127 = vsub.s32 0, %v126
  %v128 = vrot.slane %v123, %v127
  %130 = vmatprep.subr.mxu0 0.0
  %131 = vmatpush1.msra.mxu0 %v122
  %132 = vmatprep.subr.mxu0 0.0
  %133 = vmatpush1.msra.mxu0 %v121
  %134 = vmatprep.subr.mxu0 0.0
  %135 = vmatpush1.msra.mxu0 %v120
  %136 = vmatprep.subr.mxu0 0.0
  %137 = vmatpush1.msra.mxu0 %v119
  %138 = vmatprep.subr.mxu0 0.0
  %139 = vmatpush1.msra.mxu0 %v118
  %140 = vmatprep.subr.mxu0 0.0
  %141 = vmatpush1.msra.mxu0 %v117
  %142 = vmatprep.subr.mxu0 0.0
  %143 = vmatpush1.msra.mxu0 %v116
  %144 = vmatprep.subr.mxu0 0.0
  %145 = vmatpush1.msra.mxu0 %v115
  %146 = vmatprep.subr.mxu0 0.0
  %147 = vmatpush1.msra.mxu0 %v114
  %148 = vmatprep.subr.mxu0 0.0
  %149 = vmatpush1.msra.mxu0 %v113
  %150 = vmatprep.subr.mxu0 0.0
  %151 = vmatpush1.msra.mxu0 %v112
  %152 = vmatprep.subr.mxu0 0.0
  %153 = vmatpush1.msra.mxu0 %v111
  %154 = vmatprep.subr.mxu0 0.0
  %155 = vmatpush1.msra.mxu0 %v110
  %156 = vmatprep.subr.mxu0 0.0
  %157 = vmatpush1.msra.mxu0 %v109
  %158 = vmatprep.subr.mxu0 0.0
  %159 = vmatpush1.msra.mxu0 %v108
  %160 = vmatprep.subr.mxu0 0.0
  %161 = vmatpush1.msra.mxu0 %v107
  %162 = vmatprep.subr.mxu0 0.0
  %163 = vmatpush2.msra.mxu0 0.0
  %164 = vmatprep.subr.mxu0 0.0
  %165 = vmatpush2.msra.mxu0 0.0
  %166 = vmatprep.subr.mxu0 0.0
  %167 = vmatpush2.msra.mxu0 0.0
  %168 = vmatprep.subr.mxu0 0.0
  %169 = vmatpush2.msra.mxu0 0.0
  %170 = vmatprep.subr.mxu0 0.0
  %171 = vmatpush2.msra.mxu0 0.0
  %172 = vmatprep.subr.mxu0 0.0
  %173 = vmatpush2.msra.mxu0 0.0
  %174 = vmatprep.subr.mxu0 0.0
  %175 = vmatpush2.msra.mxu0 0.0
  %176 = vmatprep.subr.mxu0 0.0
  %177 = vmatpush2.msra.mxu0 0.0
  %178 = vmatprep.subr.mxu0 0.0
  %179 = vmatpush2.msra.mxu0 0.0
  %180 = vmatprep.subr.mxu0 0.0
  %181 = vmatpush2.msra.mxu0 0.0
  %182 = vmatprep.subr.mxu0 0.0
  %183 = vmatpush2.msra.mxu0 0.0
  %184 = vmatprep.subr.mxu0 0.0
  %185 = vmatpush2.msra.mxu0 0.0
  %186 = vmatprep.subr.mxu0 0.0
  %187 = vmatpush2.msra.mxu0 0.0
  %188 = vmatprep.subr.mxu0 0.0
  %189 = vmatpush2.msra.mxu0 0.0
  %190 = vmatprep.subr.mxu0 0.0
  %191 = vmatpush2.msra.mxu0 0.0
  %192 = vmatprep.subr.mxu0 0.0
  %193 = vmatpush2.msra.mxu0 0.0
  %194 = vmatprep.mubr.f32.mxu0 0.0
  %195 = vmatmul.mubr.f32.gmra.mxu0 %v106
  %v196 = vpop.f32.mrf.mxu0
  %v197 = vadd.f32 %v128, %v196
  %v198 = vpop.f32.mrf.mxu0
  %199 = vdwg.mxu0
  %vm200 = vcmask 64512
  %201 = vst.msk [vmem:[%s5] sm:$0xff] %vm200, %v197
  // Predicated region
  $region22: #{dnet_forward.1} parent=0 // pred_check
    _
  $region23: #{dnet_forward.1} parent=0 // pred_check_branch
    %203 = sbr.rel (0) target = $region25
  $region24: #{dnet_forward.1} parent=0 // pred_region
    _
  $region25: #{dnet_forward.1} parent=0 // pred_fallthru
    _
  // Predicated region
  $region26: #{dnet_forward.1} parent=0 // pred_check
    _
  $region27: #{dnet_forward.1} parent=0 // pred_check_branch
    %205 = sbr.rel (0) target = $region29
  $region28: #{dnet_forward.1} parent=0 // pred_region
    _
  $region29: #{dnet_forward.1} parent=0 // pred_fallthru
    _

</llo_original>
